<compile_context>
chip_gen: v7x
topology: tpu7x:2x2x1
jax: 0.10.0
libtpu: 0.0.40
codegen_flags: <defaults>
</compile_context>

<pallas_src>
import functools

import jax
import jax.numpy as jnp
from jax import lax
from jax.experimental import pallas as pl
from jax.experimental.pallas import tpu as pltpu


def _round_up(x, m):
    return ((x + m - 1) // m) * m


# --------------------------------------------------------------------------- #
# Kernel: one grid step == one RNN time step; weights + hidden resident in VMEM
# --------------------------------------------------------------------------- #
def charrnn_seq_kernel(ids_ref, h_in_ref,
                       emb_w0_ref, w_hh0_ref, b0_ref,
                       w_ih1_ref, w_hh1_ref, b1_ref,
                       w_out_ref, b_out_ref,
                       probs_ref, h_out_ref):
    """Fused CharRNN step.

    Block shapes seen by the kernel (all f32 unless noted):
      ids_ref   : (1, Bp, 1) int32   token ids for this time step
      h_in_ref  : (2, Bp, Hp)        initial hidden state (read only at t==0)
      emb_w0_ref: (Vp, Hp)           embedding @ W_ih0^T   (fused gather+proj)
      w_hh0_ref : (Hp, Hp)           W_hh0^T
      b0_ref    : (1, Hp)            b_ih0 + b_hh0
      w_ih1_ref : (Hp, Hp)           W_ih1^T
      w_hh1_ref : (Hp, Hp)           W_hh1^T
      b1_ref    : (1, Hp)            b_ih1 + b_hh1
      w_out_ref : (Hp, Vp)           W_out^T
      b_out_ref : (1, Vp)            b_out (padded vocab entries = -1e30)
      probs_ref : (1, Bp, Vp)        per-step log_softmax output
      h_out_ref : (2, Bp, Hp)        resident hidden-state carrier / final output
    """
    t = pl.program_id(0)

    # Seed the resident hidden-state block from the input on the first step.
    @pl.when(t == 0)
    def _():
        h_out_ref[...] = h_in_ref[...]

    Bp = ids_ref.shape[1]
    Vp = emb_w0_ref.shape[0]

    # Embedding gather fused with layer-0 input projection: one one-hot MXU matmul
    # against emb_w0 = embedding @ W_ih0^T (exact gather; padding_idx row is zero).
    ids = ids_ref[0]                                                    # (Bp, 1)
    onehot = (ids == lax.broadcasted_iota(jnp.int32, (Bp, Vp), 1)).astype(jnp.float32)
    # TODO(synk): training-mode nn.Dropout on the embedding is not implemented (eval mode).

    h0 = h_out_ref[0]                                                   # (Bp, Hp)
    h1 = h_out_ref[1]                                                   # (Bp, Hp)

    # layer 0: h0' = tanh(x @ W_ih0^T + h0 @ W_hh0^T + b0)   (no concat: two dots)
    h0n = jnp.tanh(
        jnp.dot(onehot, emb_w0_ref[...], preferred_element_type=jnp.float32)
        + jnp.dot(h0, w_hh0_ref[...], preferred_element_type=jnp.float32)
        + b0_ref[...])

    # layer 1: h1' = tanh(h0' @ W_ih1^T + h1 @ W_hh1^T + b1)
    h1n = jnp.tanh(
        jnp.dot(h0n, w_ih1_ref[...], preferred_element_type=jnp.float32)
        + jnp.dot(h1, w_hh1_ref[...], preferred_element_type=jnp.float32)
        + b1_ref[...])

    h_out_ref[0] = h0n
    h_out_ref[1] = h1n

    # output projection + log_softmax over the (padded) token axis
    logits = jnp.dot(h1n, w_out_ref[...],
                     preferred_element_type=jnp.float32) + b_out_ref[...]   # (Bp, Vp)
    m = jnp.max(logits, axis=1, keepdims=True)
    z = logits - m
    lse = jnp.log(jnp.sum(jnp.exp(z), axis=1, keepdims=True))
    probs_ref[0] = z - lse


# --------------------------------------------------------------------------- #
# Host-side parameter packing (one-time): fuse, transpose, pad to (8,128) tiles
# --------------------------------------------------------------------------- #
def pack_params(params, n_tokens, emb_size, hidden_size):
    V, E, H = n_tokens, emb_size, hidden_size
    Vp, Hp = _round_up(V, 128), _round_up(H, 128)

    # Fused embedding + layer-0 input projection: (V, H) = embedding @ W_ih0^T.
    emb_w0 = jnp.zeros((Vp, Hp), jnp.float32).at[:V, :H].set(
        params["embedding"] @ params["w_ih0"].T)
    w_hh0 = jnp.zeros((Hp, Hp), jnp.float32).at[:H, :H].set(params["w_hh0"].T)
    b0 = jnp.zeros((1, Hp), jnp.float32).at[:, :H].set(params["b_ih"][0] + params["b_hh"][0])

    w_ih1 = jnp.zeros((Hp, Hp), jnp.float32).at[:H, :H].set(params["w_ih1"].T)
    w_hh1 = jnp.zeros((Hp, Hp), jnp.float32).at[:H, :H].set(params["w_hh1"].T)
    b1 = jnp.zeros((1, Hp), jnp.float32).at[:, :H].set(params["b_ih"][1] + params["b_hh"][1])

    # Output projection, pre-transposed; padded vocab columns masked via -1e30 bias.
    w_out = jnp.zeros((Hp, Vp), jnp.float32).at[:H, :V].set(params["w_out"].T)
    b_out = jnp.full((1, Vp), -1e30, jnp.float32).at[:, :V].set(params["b_out"][0])

    return {
        "emb_w0": emb_w0, "w_hh0": w_hh0, "b0": b0,
        "w_ih1": w_ih1, "w_hh1": w_hh1, "b1": b1,
        "w_out": w_out, "b_out": b_out,
        "dims": {"V": V, "E": E, "H": H, "Vp": Vp, "Hp": Hp},
    }


# --------------------------------------------------------------------------- #
# Multi-step decode: one pallas_call for T steps (weights/hidden resident)
# --------------------------------------------------------------------------- #
def charrnn_decode(tokens, hidden, packed):
    """tokens: (B, T) int32; hidden: (L=2, B, H).
    Returns per-step log-probs (T, B, V) and the final hidden state (L, B, H).
    Equivalent to applying CharRNN.forward T times, feeding hidden forward."""
    d = packed["dims"]
    V, H, Hp, Vp = d["V"], d["H"], d["Hp"], d["Vp"]

    B, T = tokens.shape
    L = hidden.shape[0]
    assert L == 2, "this synthetic kernel is specialized to num_layers=2"
    Bp = _round_up(max(B, 8), 8)

    ids_p = jnp.zeros((T, Bp, 1), jnp.int32).at[:, :B, 0].set(tokens.T.astype(jnp.int32))
    h_p = jnp.zeros((L, Bp, Hp), jnp.float32).at[:, :B, :H].set(hidden)

    def full(shape):
        return pl.BlockSpec(shape, lambda t, _s=shape: (0,) * len(_s))

    probs_p, h_out_p = pl.pallas_call(
        charrnn_seq_kernel,
        out_shape=(
            jax.ShapeDtypeStruct((T, Bp, Vp), jnp.float32),
            jax.ShapeDtypeStruct((L, Bp, Hp), jnp.float32),
        ),
        grid=(T,),
        in_specs=[
            pl.BlockSpec((1, Bp, 1), lambda t: (t, 0, 0)),   # ids (per step)
            full((L, Bp, Hp)),                               # h_in (read at t==0)
            full((Vp, Hp)),                                  # emb_w0
            full((Hp, Hp)),                                  # w_hh0
            full((1, Hp)),                                   # b0
            full((Hp, Hp)),                                  # w_ih1
            full((Hp, Hp)),                                  # w_hh1
            full((1, Hp)),                                   # b1
            full((Hp, Vp)),                                  # w_out
            full((1, Vp)),                                   # b_out
        ],
        out_specs=(
            pl.BlockSpec((1, Bp, Vp), lambda t: (t, 0, 0)),  # per-step log-probs
            full((L, Bp, Hp)),                               # resident hidden carrier
        ),
        input_output_aliases={1: 1},                         # h_in HBM buffer == h_out
        compiler_params=pltpu.CompilerParams(
            dimension_semantics=("arbitrary",)),             # sequential recurrence
    )(
        ids_p, h_p,
        packed["emb_w0"], packed["w_hh0"], packed["b0"],
        packed["w_ih1"], packed["w_hh1"], packed["b1"],
        packed["w_out"], packed["b_out"],
    )
    return probs_p[:, :B, :V], h_out_p[:, :B, :H]


# --------------------------------------------------------------------------- #
# Module-faithful single-step forward (T == 1)
# --------------------------------------------------------------------------- #
def charrnn_forward(input_step, hidden, packed):
    probs_seq, h_out = charrnn_decode(input_step[:, None], hidden, packed)
    return probs_seq[0], h_out


# --------------------------------------------------------------------------- #
# PyTorch-convention parameter init (matches CharRNN's initializers)
# --------------------------------------------------------------------------- #
def init_params(key, n_tokens, emb_size, hidden_size, num_layers, pad_id):
    assert num_layers == 2, "this synthetic kernel is specialized to num_layers=2"
    ks = jax.random.split(key, 10)
    H, E, V = hidden_size, emb_size, n_tokens

    # nn.Embedding: N(0,1), padding row zeroed
    emb = jax.random.normal(ks[0], (V, E), jnp.float32)
    emb = emb.at[pad_id].set(0.0)

    # nn.RNN: uniform(-1/sqrt(H), 1/sqrt(H)), PyTorch [out, in] convention
    k = 1.0 / jnp.sqrt(jnp.float32(H))
    u = lambda kk, shape: jax.random.uniform(kk, shape, jnp.float32, -k, k)
    w_ih0 = u(ks[1], (H, E))
    w_hh0 = u(ks[2], (H, H))
    w_ih1 = u(ks[3], (H, H))
    w_hh1 = u(ks[4], (H, H))
    b_ih = jnp.stack([u(ks[5], (1, H)), u(ks[6], (1, H))])   # (L, 1, H)
    b_hh = jnp.stack([u(ks[7], (1, H)), u(ks[8], (1, H))])   # (L, 1, H)

    # nn.Linear(hidden, n_tokens) with xavier_normal_ on weight
    std = jnp.sqrt(2.0 / jnp.float32(H + V))
    w_out = jax.random.normal(ks[9], (V, H), jnp.float32) * std
    b_out = jnp.zeros((1, V), jnp.float32)

    return {
        "embedding": emb,
        "w_ih0": w_ih0, "w_hh0": w_hh0, "w_ih1": w_ih1, "w_hh1": w_hh1,
        "b_ih": b_ih, "b_hh": b_hh,
        "w_out": w_out, "b_out": b_out,
    }


def reference_forward(input_step, hidden, params):
    """Plain-JAX reference of the PyTorch module (for correctness check)."""
    x = jnp.take(params["embedding"], input_step, axis=0)
    h0 = jnp.tanh(x @ params["w_ih0"].T + params["b_ih"][0]
                  + hidden[0] @ params["w_hh0"].T + params["b_hh"][0])
    h1 = jnp.tanh(h0 @ params["w_ih1"].T + params["b_ih"][1]
                  + hidden[1] @ params["w_hh1"].T + params["b_hh"][1])
    logits = h1 @ params["w_out"].T + params["b_out"]
    return jax.nn.log_softmax(logits, axis=1), jnp.stack([h0, h1])


def reference_decode(tokens, hidden, params):
    probs_list = []
    h = hidden
    for t in range(tokens.shape[1]):
        p, h = reference_forward(tokens[:, t], h, params)
        probs_list.append(p)
    return jnp.stack(probs_list), h   # (T, B, V), (L, B, H)


if __name__ == "__main__":
    # Small shapes consistent with the module's forward pass.
    num_layers, n_tokens, emb_size, hidden_size, pad_id = 2, 64, 16, 32, 0
    batch, seq_len = 4, 8

    key = jax.random.PRNGKey(0)
    k_params, k_inp, k_hid, k_seq = jax.random.split(key, 4)

    params = init_params(k_params, n_tokens, emb_size, hidden_size, num_layers, pad_id)
    packed = pack_params(params, n_tokens, emb_size, hidden_size)

    input_step = jax.random.randint(k_inp, (batch,), 0, n_tokens, dtype=jnp.int32)
    hidden = jax.random.normal(k_hid, (num_layers, batch, hidden_size), jnp.float32)

    # ---- single-step forward (module semantics) ----
    fwd = jax.jit(functools.partial(charrnn_forward, packed=packed))
    probs, new_hidden = fwd(input_step, hidden)
    jax.block_until_ready((probs, new_hidden))

    assert probs.shape == (batch, n_tokens)
    assert new_hidden.shape == (num_layers, batch, hidden_size)

    ref_probs, ref_hidden = reference_forward(input_step, hidden, params)
    assert jnp.allclose(probs, ref_probs, atol=2e-3, rtol=2e-3)
    assert jnp.allclose(new_hidden, ref_hidden, atol=2e-3, rtol=2e-3)
    assert jnp.allclose(jnp.sum(jnp.exp(probs), axis=1), 1.0, atol=1e-3)

    # ---- fused multi-step decode: T steps in ONE pallas_call ----
    tokens = jax.random.randint(k_seq, (batch, seq_len), 0, n_tokens, dtype=jnp.int32)
    dec = jax.jit(functools.partial(charrnn_decode, packed=packed))
    probs_seq, h_final = dec(tokens, hidden)
    jax.block_until_ready((probs_seq, h_final))

    ref_seq, ref_hT = reference_decode(tokens, hidden, params)
    assert probs_seq.shape == (seq_len, batch, n_tokens)
    assert jnp.allclose(probs_seq, ref_seq, atol=2e-3, rtol=2e-3)
    assert jnp.allclose(h_final, ref_hT, atol=2e-3, rtol=2e-3)

    print("KERNEL_OK")
</pallas_src>

<mosaic_0001>
module attributes {stable_mosaic.version = 11 : i64} {
  func.func @charrnn_seq_kernel(%arg0: i32, %arg1: memref<1x8x1xi32, #tpu.memory_space<vmem>>, %arg2: memref<2x8x128xf32, #tpu.memory_space<vmem>>, %arg3: memref<128x128xf32, #tpu.memory_space<vmem>>, %arg4: memref<128x128xf32, #tpu.memory_space<vmem>>, %arg5: memref<1x128xf32, #tpu.memory_space<vmem>>, %arg6: memref<128x128xf32, #tpu.memory_space<vmem>>, %arg7: memref<128x128xf32, #tpu.memory_space<vmem>>, %arg8: memref<1x128xf32, #tpu.memory_space<vmem>>, %arg9: memref<128x128xf32, #tpu.memory_space<vmem>>, %arg10: memref<1x128xf32, #tpu.memory_space<vmem>>, %arg11: memref<1x8x128xf32, #tpu.memory_space<vmem>>, %arg12: memref<2x8x128xf32, #tpu.memory_space<vmem>>) attributes {dimension_semantics = [#tpu.dimension_semantics<arbitrary>], iteration_bounds = array<i64: 1>, scalar_prefetch = 0 : i64, scratch_operands = 0 : i64, tpu.core_type = #tpu.core_type<tc>, window_params = [{transform_indices = @transform_0, window_bounds = array<i64: 1, 8, 1>}, {pipeline_mode = #tpu.pipeline_mode<synchronous>, transform_indices = @transform_1, window_bounds = array<i64: 2, 8, 128>}, {pipeline_mode = #tpu.pipeline_mode<synchronous>, transform_indices = @transform_2, window_bounds = array<i64: 128, 128>}, {pipeline_mode = #tpu.pipeline_mode<synchronous>, transform_indices = @transform_3, window_bounds = array<i64: 128, 128>}, {pipeline_mode = #tpu.pipeline_mode<synchronous>, transform_indices = @transform_4, window_bounds = array<i64: 1, 128>}, {pipeline_mode = #tpu.pipeline_mode<synchronous>, transform_indices = @transform_5, window_bounds = array<i64: 128, 128>}, {pipeline_mode = #tpu.pipeline_mode<synchronous>, transform_indices = @transform_6, window_bounds = array<i64: 128, 128>}, {pipeline_mode = #tpu.pipeline_mode<synchronous>, transform_indices = @transform_7, window_bounds = array<i64: 1, 128>}, {pipeline_mode = #tpu.pipeline_mode<synchronous>, transform_indices = @transform_8, window_bounds = array<i64: 128, 128>}, {pipeline_mode = #tpu.pipeline_mode<synchronous>, transform_indices = @transform_9, window_bounds = array<i64: 1, 128>}, {transform_indices = @transform_10, window_bounds = array<i64: 1, 8, 128>}, {pipeline_mode = #tpu.pipeline_mode<synchronous>, transform_indices = @transform_11, window_bounds = array<i64: 2, 8, 128>}]} {
    %c0_i32 = arith.constant 0 : i32
    %0 = arith.cmpi eq, %arg0, %c0_i32 : i32
    %1 = arith.extui %0 : i1 to i32
    %c0_i32_0 = arith.constant 0 : i32
    %2 = arith.cmpi ne, %1, %c0_i32_0 : i32
    scf.if %2 {
      %c0_39 = arith.constant 0 : index
      %c0_40 = arith.constant 0 : index
      %c0_41 = arith.constant 0 : index
      %56 = vector.load %arg2[%c0_39, %c0_40, %c0_41] : memref<2x8x128xf32, #tpu.memory_space<vmem>>, vector<2x8x128xf32>
      %c0_42 = arith.constant 0 : index
      %c0_43 = arith.constant 0 : index
      %c0_44 = arith.constant 0 : index
      %57 = vector.load %arg12[%c0_42, %c0_43, %c0_44] : memref<2x8x128xf32, #tpu.memory_space<vmem>>, vector<2x8x128xf32>
      tpu.vector_store %arg12[%c0_42, %c0_43, %c0_44], %56 {strides = array<i32>} : memref<2x8x128xf32, #tpu.memory_space<vmem>>, vector<2x8x128xf32>,
    } else {
    }
    %c0 = arith.constant 0 : index
    %c0_1 = arith.constant 0 : index
    %c0_2 = arith.constant 0 : index
    %3 = vector.load %arg1[%c0, %c0_1, %c0_2] : memref<1x8x1xi32, #tpu.memory_space<vmem>>, vector<1x8x1xi32>
    %4 = vector.shape_cast %3 : vector<1x8x1xi32> to vector<8x1xi32>
    %5 = tpu.iota {dimensions = array<i32: 1>} : vector<8x128xi32>
    %6 = vector.broadcast %4 : vector<8x1xi32> to vector<8x128xi32>
    %7 = arith.cmpi eq, %6, %5 : vector<8x128xi32>
    %8 = arith.extui %7 : vector<8x128xi1> to vector<8x128xi32>
    %9 = arith.sitofp %8 : vector<8x128xi32> to vector<8x128xf32>
    %c0_3 = arith.constant 0 : index
    %c0_4 = arith.constant 0 : index
    %c0_5 = arith.constant 0 : index
    %10 = vector.load %arg12[%c0_3, %c0_4, %c0_5] : memref<2x8x128xf32, #tpu.memory_space<vmem>>, vector<1x8x128xf32>
    %11 = vector.shape_cast %10 : vector<1x8x128xf32> to vector<8x128xf32>
    %c1 = arith.constant 1 : index
    %c0_6 = arith.constant 0 : index
    %c0_7 = arith.constant 0 : index
    %12 = vector.load %arg12[%c1, %c0_6, %c0_7] : memref<2x8x128xf32, #tpu.memory_space<vmem>>, vector<1x8x128xf32>
    %13 = vector.shape_cast %12 : vector<1x8x128xf32> to vector<8x128xf32>
    %c0_8 = arith.constant 0 : index
    %c0_9 = arith.constant 0 : index
    %14 = vector.load %arg3[%c0_8, %c0_9] : memref<128x128xf32, #tpu.memory_space<vmem>>, vector<128x128xf32>
    %cst = arith.constant dense<0.000000e+00> : vector<8x128xf32>
    %15 = tpu.matmul %9, %14, %cst {dimension_numbers = #tpu.dot_dimension_numbers<[1], [0], [0], [1], [0, 0, 1, 1], [], []>} : vector<8x128xf32>, vector<128x128xf32>, vector<8x128xf32> -> vector<8x128xf32>
    %c0_10 = arith.constant 0 : index
    %c0_11 = arith.constant 0 : index
    %16 = vector.load %arg4[%c0_10, %c0_11] : memref<128x128xf32, #tpu.memory_space<vmem>>, vector<128x128xf32>
    %cst_12 = arith.constant dense<0.000000e+00> : vector<8x128xf32>
    %17 = tpu.matmul %11, %16, %cst_12 {dimension_numbers = #tpu.dot_dimension_numbers<[1], [0], [0], [1], [0, 0, 1, 1], [], []>} : vector<8x128xf32>, vector<128x128xf32>, vector<8x128xf32> -> vector<8x128xf32>
    %18 = arith.addf %15, %17 : vector<8x128xf32>
    %c0_13 = arith.constant 0 : index
    %c0_14 = arith.constant 0 : index
    %19 = vector.load %arg5[%c0_13, %c0_14] : memref<1x128xf32, #tpu.memory_space<vmem>>, vector<1x128xf32>
    %20 = vector.broadcast %19 : vector<1x128xf32> to vector<8x128xf32>
    %21 = arith.addf %18, %20 : vector<8x128xf32>
    %22 = math.tanh %21 : vector<8x128xf32>
    %c0_15 = arith.constant 0 : index
    %c0_16 = arith.constant 0 : index
    %23 = vector.load %arg6[%c0_15, %c0_16] : memref<128x128xf32, #tpu.memory_space<vmem>>, vector<128x128xf32>
    %cst_17 = arith.constant dense<0.000000e+00> : vector<8x128xf32>
    %24 = tpu.matmul %22, %23, %cst_17 {dimension_numbers = #tpu.dot_dimension_numbers<[1], [0], [0], [1], [0, 0, 1, 1], [], []>} : vector<8x128xf32>, vector<128x128xf32>, vector<8x128xf32> -> vector<8x128xf32>
    %c0_18 = arith.constant 0 : index
    %c0_19 = arith.constant 0 : index
    %25 = vector.load %arg7[%c0_18, %c0_19] : memref<128x128xf32, #tpu.memory_space<vmem>>, vector<128x128xf32>
    %cst_20 = arith.constant dense<0.000000e+00> : vector<8x128xf32>
    %26 = tpu.matmul %13, %25, %cst_20 {dimension_numbers = #tpu.dot_dimension_numbers<[1], [0], [0], [1], [0, 0, 1, 1], [], []>} : vector<8x128xf32>, vector<128x128xf32>, vector<8x128xf32> -> vector<8x128xf32>
    %27 = arith.addf %24, %26 : vector<8x128xf32>
    %c0_21 = arith.constant 0 : index
    %c0_22 = arith.constant 0 : index
    %28 = vector.load %arg8[%c0_21, %c0_22] : memref<1x128xf32, #tpu.memory_space<vmem>>, vector<1x128xf32>
    %29 = vector.broadcast %28 : vector<1x128xf32> to vector<8x128xf32>
    %30 = arith.addf %27, %29 : vector<8x128xf32>
    %31 = math.tanh %30 : vector<8x128xf32>
    %c0_23 = arith.constant 0 : index
    %c0_24 = arith.constant 0 : index
    %c0_25 = arith.constant 0 : index
    %32 = vector.load %arg12[%c0_23, %c0_24, %c0_25] : memref<2x8x128xf32, #tpu.memory_space<vmem>>, vector<1x8x128xf32>
    %33 = vector.shape_cast %32 : vector<1x8x128xf32> to vector<8x128xf32>
    %34 = vector.shape_cast %22 : vector<8x128xf32> to vector<1x8x128xf32>
    tpu.vector_store %arg12[%c0_23, %c0_24, %c0_25], %34 {strides = array<i32>} : memref<2x8x128xf32, #tpu.memory_space<vmem>>, vector<1x8x128xf32>,
    %c1_26 = arith.constant 1 : index
    %c0_27 = arith.constant 0 : index
    %c0_28 = arith.constant 0 : index
    %35 = vector.load %arg12[%c1_26, %c0_27, %c0_28] : memref<2x8x128xf32, #tpu.memory_space<vmem>>, vector<1x8x128xf32>
    %36 = vector.shape_cast %35 : vector<1x8x128xf32> to vector<8x128xf32>
    %37 = vector.shape_cast %31 : vector<8x128xf32> to vector<1x8x128xf32>
    tpu.vector_store %arg12[%c1_26, %c0_27, %c0_28], %37 {strides = array<i32>} : memref<2x8x128xf32, #tpu.memory_space<vmem>>, vector<1x8x128xf32>,
    %c0_29 = arith.constant 0 : index
    %c0_30 = arith.constant 0 : index
    %38 = vector.load %arg9[%c0_29, %c0_30] : memref<128x128xf32, #tpu.memory_space<vmem>>, vector<128x128xf32>
    %cst_31 = arith.constant dense<0.000000e+00> : vector<8x128xf32>
    %39 = tpu.matmul %31, %38, %cst_31 {dimension_numbers = #tpu.dot_dimension_numbers<[1], [0], [0], [1], [0, 0, 1, 1], [], []>} : vector<8x128xf32>, vector<128x128xf32>, vector<8x128xf32> -> vector<8x128xf32>
    %c0_32 = arith.constant 0 : index
    %c0_33 = arith.constant 0 : index
    %40 = vector.load %arg10[%c0_32, %c0_33] : memref<1x128xf32, #tpu.memory_space<vmem>>, vector<1x128xf32>
    %41 = vector.broadcast %40 : vector<1x128xf32> to vector<8x128xf32>
    %42 = arith.addf %39, %41 : vector<8x128xf32>
    %cst_34 = arith.constant dense<0xFF800000> : vector<8xf32>
    %43 = vector.multi_reduction <maximumf>, %42, %cst_34 [1] : vector<8x128xf32> to vector<8xf32>
    %44 = vector.shape_cast %43 : vector<8xf32> to vector<8x1xf32>
    %45 = vector.broadcast %44 : vector<8x1xf32> to vector<8x128xf32>
    %46 = arith.subf %42, %45 : vector<8x128xf32>
    %47 = math.exp %46 : vector<8x128xf32>
    %cst_35 = arith.constant dense<0.000000e+00> : vector<8xf32>
    %48 = vector.multi_reduction <add>, %47, %cst_35 [1] : vector<8x128xf32> to vector<8xf32>
    %49 = vector.shape_cast %48 : vector<8xf32> to vector<8x1xf32>
    %50 = math.log %49 : vector<8x1xf32>
    %51 = vector.broadcast %50 : vector<8x1xf32> to vector<8x128xf32>
    %52 = arith.subf %46, %51 : vector<8x128xf32>
    %c0_36 = arith.constant 0 : index
    %c0_37 = arith.constant 0 : index
    %c0_38 = arith.constant 0 : index
    %53 = vector.load %arg11[%c0_36, %c0_37, %c0_38] : memref<1x8x128xf32, #tpu.memory_space<vmem>>, vector<1x8x128xf32>
    %54 = vector.shape_cast %53 : vector<1x8x128xf32> to vector<8x128xf32>
    %55 = vector.shape_cast %52 : vector<8x128xf32> to vector<1x8x128xf32>
    tpu.vector_store %arg11[%c0_36, %c0_37, %c0_38], %55 {strides = array<i32>} : memref<1x8x128xf32, #tpu.memory_space<vmem>>, vector<1x8x128xf32>,
    return
  }
  func.func @transform_0(%arg0: i32) -> (i32, i32, i32) {
    %c0_i32 = arith.constant 0 : i32
    %c0_i32_0 = arith.constant 0 : i32
    %c0_i32_1 = arith.constant 0 : i32
    return %arg0, %c0_i32, %c0_i32_0 : i32, i32, i32
  }
  func.func @transform_1(%arg0: i32) -> (i32, i32, i32) {
    %c0_i32 = arith.constant 0 : i32
    %c0_i32_0 = arith.constant 0 : i32
    %c0_i32_1 = arith.constant 0 : i32
    %c0_i32_2 = arith.constant 0 : i32
    return %c0_i32, %c0_i32_0, %c0_i32_1 : i32, i32, i32
  }
  func.func @transform_2(%arg0: i32) -> (i32, i32) {
    %c0_i32 = arith.constant 0 : i32
    %c0_i32_0 = arith.constant 0 : i32
    %c0_i32_1 = arith.constant 0 : i32
    return %c0_i32, %c0_i32_0 : i32, i32
  }
  func.func @transform_3(%arg0: i32) -> (i32, i32) {
    %c0_i32 = arith.constant 0 : i32
    %c0_i32_0 = arith.constant 0 : i32
    %c0_i32_1 = arith.constant 0 : i32
    return %c0_i32, %c0_i32_0 : i32, i32
  }
  func.func @transform_4(%arg0: i32) -> (i32, i32) {
    %c0_i32 = arith.constant 0 : i32
    %c0_i32_0 = arith.constant 0 : i32
    %c0_i32_1 = arith.constant 0 : i32
    return %c0_i32, %c0_i32_0 : i32, i32
  }
  func.func @transform_5(%arg0: i32) -> (i32, i32) {
    %c0_i32 = arith.constant 0 : i32
    %c0_i32_0 = arith.constant 0 : i32
    %c0_i32_1 = arith.constant 0 : i32
    return %c0_i32, %c0_i32_0 : i32, i32
  }
  func.func @transform_6(%arg0: i32) -> (i32, i32) {
    %c0_i32 = arith.constant 0 : i32
    %c0_i32_0 = arith.constant 0 : i32
    %c0_i32_1 = arith.constant 0 : i32
    return %c0_i32, %c0_i32_0 : i32, i32
  }
  func.func @transform_7(%arg0: i32) -> (i32, i32) {
    %c0_i32 = arith.constant 0 : i32
    %c0_i32_0 = arith.constant 0 : i32
    %c0_i32_1 = arith.constant 0 : i32
    return %c0_i32, %c0_i32_0 : i32, i32
  }
  func.func @transform_8(%arg0: i32) -> (i32, i32) {
    %c0_i32 = arith.constant 0 : i32
    %c0_i32_0 = arith.constant 0 : i32
    %c0_i32_1 = arith.constant 0 : i32
    return %c0_i32, %c0_i32_0 : i32, i32
  }
  func.func @transform_9(%arg0: i32) -> (i32, i32) {
    %c0_i32 = arith.constant 0 : i32
    %c0_i32_0 = arith.constant 0 : i32
    %c0_i32_1 = arith.constant 0 : i32
    return %c0_i32, %c0_i32_0 : i32, i32
  }
  func.func @transform_10(%arg0: i32) -> (i32, i32, i32) {
    %c0_i32 = arith.constant 0 : i32
    %c0_i32_0 = arith.constant 0 : i32
    %c0_i32_1 = arith.constant 0 : i32
    return %arg0, %c0_i32, %c0_i32_0 : i32, i32, i32
  }
  func.func @transform_11(%arg0: i32) -> (i32, i32, i32) {
    %c0_i32 = arith.constant 0 : i32
    %c0_i32_0 = arith.constant 0 : i32
    %c0_i32_1 = arith.constant 0 : i32
    %c0_i32_2 = arith.constant 0 : i32
    return %c0_i32, %c0_i32_0, %c0_i32_1 : i32, i32, i32
  }
}

</mosaic_0001>

<llo_original>
// kernel: charrnn_forward.1
$region0: #{charrnn_forward.1}
  #allocation0 [shape = 'u32[]', space=smem, size = 0x4, offset = 0x4, fixed_abs, tag = 'smem constant byte address 0x4 - core index']
  #allocation1 [shape = 'u32[144,128]{1,0:T(1,128)}', space=vmem, size = 0x12000, scoped, tag = 'internal scratch']
  %s0 = inlined_call_operand.vmem [shape: s32[1,8,1], index: 0, kind: input, shape index: {}]
  %s1 = inlined_call_operand.vmem [shape: f32[2,8,128], index: 1, kind: input, shape index: {}, may-alias: {1,11}]
  %s2 = inlined_call_operand.hbm [shape: f32[128,128], index: 2, kind: input, shape index: {}]
  %s3 = inlined_call_operand.hbm [shape: f32[128,128], index: 3, kind: input, shape index: {}]
  %s4 = inlined_call_operand.vmem [shape: f32[1,128], index: 4, kind: input, shape index: {}]
  %s5 = inlined_call_operand.hbm [shape: f32[128,128], index: 5, kind: input, shape index: {}]
  %s6 = inlined_call_operand.hbm [shape: f32[128,128], index: 6, kind: input, shape index: {}]
  %s7 = inlined_call_operand.vmem [shape: f32[1,128], index: 7, kind: input, shape index: {}]
  %s8 = inlined_call_operand.hbm [shape: f32[128,128], index: 8, kind: input, shape index: {}]
  %s9 = inlined_call_operand.vmem [shape: f32[1,128], index: 9, kind: input, shape index: {}]
  %s10 = inlined_call_operand.vmem [shape: f32[1,8,128], index: 10, kind: output, shape index: {0}]
  %s11 = inlined_call_operand.vmem [shape: f32[2,8,128], index: 11, kind: output, shape index: {1}, may-alias: {1,11}]
  %12 = xla_tuple %s10, %s11
  %s13 = sld [smem:[#allocation0]]
  $region82: #{charrnn_forward.1} parent=0
    _
  %s15 = ssub.s32 1, %s13
  %s16 = scalar_select 0, %s15, %s13
  $region1: #{charrnn_forward.1} parent=0
    #allocation2 [shape = 'u8[65536]{0}', space=vmem, size = 0x10000, scoped, tag = 'input window, operand 2, single buffered']
    #allocation3 [shape = 's32[1]{0}', space=sflag, size = 0x4, scoped, tag = 'scoped memory for charrnn_forward.1']
    #allocation4 [shape = 'u8[65536]{0}', space=vmem, size = 0x10000, scoped, tag = 'input window, operand 3, single buffered']
    #allocation5 [shape = 's32[1]{0}', space=sflag, size = 0x4, scoped, tag = 'scoped memory for charrnn_forward.1']
    #allocation6 [shape = 'u8[65536]{0}', space=vmem, size = 0x10000, scoped, tag = 'input window, operand 5, single buffered']
    #allocation7 [shape = 'u8[65536]{0}', space=vmem, size = 0x10000, scoped, tag = 'input window, operand 6, single buffered']
    #allocation8 [shape = 's32[1]{0}', space=sflag, size = 0x4, scoped, tag = 'scoped memory for charrnn_forward.1']
    #allocation9 [shape = 'u8[65536]{0}', space=vmem, size = 0x10000, scoped, tag = 'input window, operand 8, single buffered']
    %17 = vsyncpa [#allocation3], 0
    %18 = vsyncpa [#allocation5], 0
    %19 = vsyncpa [#allocation8], 0
    // Predicated region
    $region2: #{charrnn_forward.1} parent=1 // pred_check
      _
    $region3: #{charrnn_forward.1} parent=1 // pred_check_branch
      %21 = sbr.rel (0) target = $region5
    $region4: #{charrnn_forward.1} parent=1 // pred_region
      _
    $region5: #{charrnn_forward.1} parent=1 // pred_fallthru
      _
    // Predicated region
    $region6: #{charrnn_forward.1} parent=1 // pred_check
      _
    $region7: #{charrnn_forward.1} parent=1 // pred_check_branch
      %23 = sbr.rel (0) target = $region9
    $region8: #{charrnn_forward.1} parent=1 // pred_region
      _
    $region9: #{charrnn_forward.1} parent=1 // pred_fallthru
      _
    // Predicated region
    $region10: #{charrnn_forward.1} parent=1 // pred_check
      _
    $region11: #{charrnn_forward.1} parent=1 // pred_check_branch
      %25 = sbr.rel (0) target = $region13
    $region12: #{charrnn_forward.1} parent=1 // pred_region
      %s27 = ssub.s32 2048, 2048
      %28 = vsyncadd [#allocation3], %s27
      %s29 = sshll.u32 [#allocation2], 4
      %s30 = int_to_ptr.vmem [resolvable:$true] %s29
      %35 = dma.hbm_to_vmem [thread:$0]  %s2, 2048, %s30, [#allocation3], 128, 128, 8
    $region13: #{charrnn_forward.1} parent=1 // pred_fallthru
      _
    // Predicated region
    $region14: #{charrnn_forward.1} parent=1 // pred_check
      _
    $region15: #{charrnn_forward.1} parent=1 // pred_check_branch
      %37 = sbr.rel (0) target = $region17
    $region16: #{charrnn_forward.1} parent=1 // pred_region
      %s39 = ssub.s32 2048, 2048
      %40 = vsyncadd [#allocation5], %s39
      %s41 = sshll.u32 [#allocation4], 4
      %s42 = int_to_ptr.vmem [resolvable:$true] %s41
      %47 = dma.hbm_to_vmem [thread:$0]  %s3, 2048, %s42, [#allocation5], 128, 128, 8
    $region17: #{charrnn_forward.1} parent=1 // pred_fallthru
      _
    // Predicated region
    $region18: #{charrnn_forward.1} parent=1 // pred_check
      _
    $region19: #{charrnn_forward.1} parent=1 // pred_check_branch
      %49 = sbr.rel (0) target = $region21
    $region20: #{charrnn_forward.1} parent=1 // pred_region
      _
    $region21: #{charrnn_forward.1} parent=1 // pred_fallthru
      _
    // Predicated region
    $region22: #{charrnn_forward.1} parent=1 // pred_check
      _
    $region23: #{charrnn_forward.1} parent=1 // pred_check_branch
      %51 = sbr.rel (0) target = $region25
    $region24: #{charrnn_forward.1} parent=1 // pred_region
      %s53 = ssub.s32 2048, 2048
      %54 = vsyncadd [#allocation5], %s53
      %s55 = sshll.u32 [#allocation6], 4
      %s56 = int_to_ptr.vmem [resolvable:$true] %s55
      %61 = dma.hbm_to_vmem [thread:$0]  %s5, 2048, %s56, [#allocation5], 128, 128, 8
    $region25: #{charrnn_forward.1} parent=1 // pred_fallthru
      _
    // Predicated region
    $region26: #{charrnn_forward.1} parent=1 // pred_check
      _
    $region27: #{charrnn_forward.1} parent=1 // pred_check_branch
      %63 = sbr.rel (0) target = $region29
    $region28: #{charrnn_forward.1} parent=1 // pred_region
      %s65 = ssub.s32 2048, 2048
      %66 = vsyncadd [#allocation8], %s65
      %s67 = sshll.u32 [#allocation7], 4
      %s68 = int_to_ptr.vmem [resolvable:$true] %s67
      %73 = dma.hbm_to_vmem [thread:$0]  %s6, 2048, %s68, [#allocation8], 128, 128, 8
    $region29: #{charrnn_forward.1} parent=1 // pred_fallthru
      _
    // Predicated region
    $region30: #{charrnn_forward.1} parent=1 // pred_check
      _
    $region31: #{charrnn_forward.1} parent=1 // pred_check_branch
      %75 = sbr.rel (0) target = $region33
    $region32: #{charrnn_forward.1} parent=1 // pred_region
      _
    $region33: #{charrnn_forward.1} parent=1 // pred_fallthru
      _
    // Predicated region
    $region34: #{charrnn_forward.1} parent=1 // pred_check
      _
    $region35: #{charrnn_forward.1} parent=1 // pred_check_branch
      %77 = sbr.rel (0) target = $region37
    $region36: #{charrnn_forward.1} parent=1 // pred_region
      %s79 = ssub.s32 2048, 2048
      %80 = vsyncadd [#allocation8], %s79
      %s81 = sshll.u32 [#allocation9], 4
      %s82 = int_to_ptr.vmem [resolvable:$true] %s81
      %87 = dma.hbm_to_vmem [thread:$0]  %s8, 2048, %s82, [#allocation8], 128, 128, 8
    $region37: #{charrnn_forward.1} parent=1 // pred_fallthru
      _
    // Predicated region
    $region38: #{charrnn_forward.1} parent=1 // pred_check
      _
    $region39: #{charrnn_forward.1} parent=1 // pred_check_branch
      %89 = sbr.rel (0) target = $region41
    $region40: #{charrnn_forward.1} parent=1 // pred_region
      _
    $region41: #{charrnn_forward.1} parent=1 // pred_fallthru
      _
    // Predicated region
    $region42: #{charrnn_forward.1} parent=1 // pred_check
      _
    $region43: #{charrnn_forward.1} parent=1 // pred_check_branch
      %91 = sbr.rel (0) target = $region45
    $region44: #{charrnn_forward.1} parent=1 // pred_region
      %92 = dma.done [#allocation3], 2048
    $region45: #{charrnn_forward.1} parent=1 // pred_fallthru
      _
    // Predicated region
    $region46: #{charrnn_forward.1} parent=1 // pred_check
      _
    $region47: #{charrnn_forward.1} parent=1 // pred_check_branch
      %94 = sbr.rel (0) target = $region49
    $region48: #{charrnn_forward.1} parent=1 // pred_region
      %95 = dma.done [#allocation5], 2048
    $region49: #{charrnn_forward.1} parent=1 // pred_fallthru
      _
    // Predicated region
    $region50: #{charrnn_forward.1} parent=1 // pred_check
      _
    $region51: #{charrnn_forward.1} parent=1 // pred_check_branch
      %97 = sbr.rel (0) target = $region53
    $region52: #{charrnn_forward.1} parent=1 // pred_region
      %98 = dma.done [#allocation5], 2048
    $region53: #{charrnn_forward.1} parent=1 // pred_fallthru
      _
    // Predicated region
    $region54: #{charrnn_forward.1} parent=1 // pred_check
      _
    $region55: #{charrnn_forward.1} parent=1 // pred_check_branch
      %100 = sbr.rel (0) target = $region57
    $region56: #{charrnn_forward.1} parent=1 // pred_region
      %101 = dma.done [#allocation8], 2048
    $region57: #{charrnn_forward.1} parent=1 // pred_fallthru
      _
    // Predicated region
    $region58: #{charrnn_forward.1} parent=1 // pred_check
      _
    $region59: #{charrnn_forward.1} parent=1 // pred_check_branch
      %103 = sbr.rel (0) target = $region61
    $region60: #{charrnn_forward.1} parent=1 // pred_region
      %104 = dma.done [#allocation8], 2048
    $region61: #{charrnn_forward.1} parent=1 // pred_fallthru
      _
    %p105 = scmp.eq.s32.totalorder 0, 0
    // Predicated region
    $region62: #{charrnn_forward.1} parent=1 // pred_check
      %p106 = pneg %p105
    $region63: #{charrnn_forward.1} parent=1 // pred_check_branch
      %108 = sbr.rel (%p106) target = $region65
    $region64: #{charrnn_forward.1} parent=1 // pred_region
      %v109 = vld [vmem:[%s1] sm:$0xff]
      %v110 = vld [vmem:[%s1 + $0x8] sm:$0xff]
      %111 = vst [vmem:[%s11] sm:$0xff] %v109
      %112 = vst [vmem:[%s11 + $0x8] sm:$0xff] %v110
    $region65: #{charrnn_forward.1} parent=1 // pred_fallthru
      _
    %v113 = vld [vmem:[%s0] sm:$0xff]
    %v114 = vlaneseq
    %v115 = vand.u32 %v114, 127
    %116 = vset.pattern.permute.xlu0 0
    %117 = vperm.xlu0 %116, %v113
    %v118 = vpop.permute.xlu0 %117
    %vm119 = vcmp.eq.s32.totalorder %v118, %v115
    %v120 = vsel %vm119, 1, 0
    %v121 = vcvt.s32.f32 %v120
    %v122 = vld [vmem:[%s11] sm:$0xff]
    %s123 = scalar_lea.vmem %s11, 8
    %v124 = vld [vmem:[%s123] sm:$0xff]
    %v125 = vld [vmem:[#allocation2] sm:$0xff]
    %v126 = vld [vmem:[#allocation2 + $0x8] sm:$0xff]
    %v127 = vld [vmem:[#allocation2 + $0x10] sm:$0xff]
    %v128 = vld [vmem:[#allocation2 + $0x18] sm:$0xff]
    %v129 = vld [vmem:[#allocation2 + $0x20] sm:$0xff]
    %v130 = vld [vmem:[#allocation2 + $0x28] sm:$0xff]
    %v131 = vld [vmem:[#allocation2 + $0x30] sm:$0xff]
    %v132 = vld [vmem:[#allocation2 + $0x38] sm:$0xff]
    %v133 = vld [vmem:[#allocation2 + $0x40] sm:$0xff]
    %v134 = vld [vmem:[#allocation2 + $0x48] sm:$0xff]
    %v135 = vld [vmem:[#allocation2 + $0x50] sm:$0xff]
    %v136 = vld [vmem:[#allocation2 + $0x58] sm:$0xff]
    %v137 = vld [vmem:[#allocation2 + $0x60] sm:$0xff]
    %v138 = vld [vmem:[#allocation2 + $0x68] sm:$0xff]
    %v139 = vld [vmem:[#allocation2 + $0x70] sm:$0xff]
    %v140 = vld [vmem:[#allocation2 + $0x78] sm:$0xff]
    %v141 = vld [vmem:[#allocation4] sm:$0xff]
    %v142 = vld [vmem:[#allocation4 + $0x8] sm:$0xff]
    %v143 = vld [vmem:[#allocation4 + $0x10] sm:$0xff]
    %v144 = vld [vmem:[#allocation4 + $0x18] sm:$0xff]
    %v145 = vld [vmem:[#allocation4 + $0x20] sm:$0xff]
    %v146 = vld [vmem:[#allocation4 + $0x28] sm:$0xff]
    %v147 = vld [vmem:[#allocation4 + $0x30] sm:$0xff]
    %v148 = vld [vmem:[#allocation4 + $0x38] sm:$0xff]
    %v149 = vld [vmem:[#allocation4 + $0x40] sm:$0xff]
    %v150 = vld [vmem:[#allocation4 + $0x48] sm:$0xff]
    %v151 = vld [vmem:[#allocation4 + $0x50] sm:$0xff]
    %v152 = vld [vmem:[#allocation4 + $0x58] sm:$0xff]
    %v153 = vld [vmem:[#allocation4 + $0x60] sm:$0xff]
    %v154 = vld [vmem:[#allocation4 + $0x68] sm:$0xff]
    %v155 = vld [vmem:[#allocation4 + $0x70] sm:$0xff]
    %v156 = vld [vmem:[#allocation4 + $0x78] sm:$0xff]
    %157 = vmatprep.subr.mxu0 0.0
    %158 = vmatpush1.msra.mxu0 %v141
    %159 = vmatprep.subr.mxu0 0.0
    %160 = vmatpush1.msra.mxu0 %v142
    %161 = vmatprep.subr.mxu0 0.0
    %162 = vmatpush1.msra.mxu0 %v143
    %163 = vmatprep.subr.mxu0 0.0
    %164 = vmatpush1.msra.mxu0 %v144
    %165 = vmatprep.subr.mxu0 0.0
    %166 = vmatpush1.msra.mxu0 %v145
    %167 = vmatprep.subr.mxu0 0.0
    %168 = vmatpush1.msra.mxu0 %v146
    %169 = vmatprep.subr.mxu0 0.0
    %170 = vmatpush1.msra.mxu0 %v147
    %171 = vmatprep.subr.mxu0 0.0
    %172 = vmatpush1.msra.mxu0 %v148
    %173 = vmatprep.subr.mxu0 0.0
    %174 = vmatpush1.msra.mxu0 %v149
    %175 = vmatprep.subr.mxu0 0.0
    %176 = vmatpush1.msra.mxu0 %v150
    %177 = vmatprep.subr.mxu0 0.0
    %178 = vmatpush1.msra.mxu0 %v151
    %179 = vmatprep.subr.mxu0 0.0
    %180 = vmatpush1.msra.mxu0 %v152
    %181 = vmatprep.subr.mxu0 0.0
    %182 = vmatpush1.msra.mxu0 %v153
    %183 = vmatprep.subr.mxu0 0.0
    %184 = vmatpush1.msra.mxu0 %v154
    %185 = vmatprep.subr.mxu0 0.0
    %186 = vmatpush1.msra.mxu0 %v155
    %187 = vmatprep.subr.mxu0 0.0
    %188 = vmatpush1.msra.mxu0 %v156
    %189 = vmatprep.subr.mxu0 0.0
    %190 = vmatpush1.msra.mxu0 0.0
    %191 = vmatprep.subr.mxu0 0.0
    %192 = vmatpush1.msra.mxu0 0.0
    %193 = vmatprep.subr.mxu0 0.0
    %194 = vmatpush1.msra.mxu0 0.0
    %195 = vmatprep.subr.mxu0 0.0
    %196 = vmatpush1.msra.mxu0 0.0
    %197 = vmatprep.subr.mxu0 0.0
    %198 = vmatpush1.msra.mxu0 0.0
    %199 = vmatprep.subr.mxu0 0.0
    %200 = vmatpush1.msra.mxu0 0.0
    %201 = vmatprep.subr.mxu0 0.0
    %202 = vmatpush1.msra.mxu0 0.0
    %203 = vmatprep.subr.mxu0 0.0
    %204 = vmatpush1.msra.mxu0 0.0
    %205 = vmatprep.subr.mxu0 0.0
    %206 = vmatpush1.msra.mxu0 0.0
    %207 = vmatprep.subr.mxu0 0.0
    %208 = vmatpush1.msra.mxu0 0.0
    %209 = vmatprep.subr.mxu0 0.0
    %210 = vmatpush1.msra.mxu0 0.0
    %211 = vmatprep.subr.mxu0 0.0
    %212 = vmatpush1.msra.mxu0 0.0
    %213 = vmatprep.subr.mxu0 0.0
    %214 = vmatpush1.msra.mxu0 0.0
    %215 = vmatprep.subr.mxu0 0.0
    %216 = vmatpush1.msra.mxu0 0.0
    %217 = vmatprep.subr.mxu0 0.0
    %218 = vmatpush1.msra.mxu0 0.0
    %219 = vmatprep.subr.mxu0 0.0
    %220 = vmatpush1.msra.mxu0 0.0
    %221 = vmatprep.mubr.f32.mxu0 0.0
    %222 = vmatmul.mubr.f32.gmra.mrb[0].mxu0 %v122
    %v223 = vpop.f32.mrb[0].mxu0
    %v224 = vadd.f32 0.0, %v223
    %v225 = vpop.f32.mrb[0].mxu0
    %226 = vdwg.mxu0
    %227 = vmatprep.subr.mxu0 0.0
    %228 = vmatpush1.msra.mxu0 %v125
    %229 = vmatprep.subr.mxu0 0.0
    %230 = vmatpush1.msra.mxu0 %v126
    %231 = vmatprep.subr.mxu0 0.0
    %232 = vmatpush1.msra.mxu0 %v127
    %233 = vmatprep.subr.mxu0 0.0
    %234 = vmatpush1.msra.mxu0 %v128
    %235 = vmatprep.subr.mxu0 0.0
    %236 = vmatpush1.msra.mxu0 %v129
    %237 = vmatprep.subr.mxu0 0.0
    %238 = vmatpush1.msra.mxu0 %v130
    %239 = vmatprep.subr.mxu0 0.0
    %240 = vmatpush1.msra.mxu0 %v131
    %241 = vmatprep.subr.mxu0 0.0
    %242 = vmatpush1.msra.mxu0 %v132
    %243 = vmatprep.subr.mxu0 0.0
    %244 = vmatpush1.msra.mxu0 %v133
    %245 = vmatprep.subr.mxu0 0.0
    %246 = vmatpush1.msra.mxu0 %v134
    %247 = vmatprep.subr.mxu0 0.0
    %248 = vmatpush1.msra.mxu0 %v135
    %249 = vmatprep.subr.mxu0 0.0
    %250 = vmatpush1.msra.mxu0 %v136
    %251 = vmatprep.subr.mxu0 0.0
    %252 = vmatpush1.msra.mxu0 %v137
    %253 = vmatprep.subr.mxu0 0.0
    %254 = vmatpush1.msra.mxu0 %v138
    %255 = vmatprep.subr.mxu0 0.0
    %256 = vmatpush1.msra.mxu0 %v139
    %257 = vmatprep.subr.mxu0 0.0
    %258 = vmatpush1.msra.mxu0 %v140
    %259 = vmatprep.subr.mxu0 0.0
    %260 = vmatpush1.msra.mxu0 0.0
    %261 = vmatprep.subr.mxu0 0.0
    %262 = vmatpush1.msra.mxu0 0.0
    %263 = vmatprep.subr.mxu0 0.0
    %264 = vmatpush1.msra.mxu0 0.0
    %265 = vmatprep.subr.mxu0 0.0
    %266 = vmatpush1.msra.mxu0 0.0
    %267 = vmatprep.subr.mxu0 0.0
    %268 = vmatpush1.msra.mxu0 0.0
    %269 = vmatprep.subr.mxu0 0.0
    %270 = vmatpush1.msra.mxu0 0.0
    %271 = vmatprep.subr.mxu0 0.0
    %272 = vmatpush1.msra.mxu0 0.0
    %273 = vmatprep.subr.mxu0 0.0
    %274 = vmatpush1.msra.mxu0 0.0
    %275 = vmatprep.subr.mxu0 0.0
    %276 = vmatpush1.msra.mxu0 0.0
    %277 = vmatprep.subr.mxu0 0.0
    %278 = vmatpush1.msra.mxu0 0.0
    %279 = vmatprep.subr.mxu0 0.0
    %280 = vmatpush1.msra.mxu0 0.0
    %281 = vmatprep.subr.mxu0 0.0
    %282 = vmatpush1.msra.mxu0 0.0
    %283 = vmatprep.subr.mxu0 0.0
    %284 = vmatpush1.msra.mxu0 0.0
    %285 = vmatprep.subr.mxu0 0.0
    %286 = vmatpush1.msra.mxu0 0.0
    %287 = vmatprep.subr.mxu0 0.0
    %288 = vmatpush1.msra.mxu0 0.0
    %289 = vmatprep.subr.mxu0 0.0
    %290 = vmatpush1.msra.mxu0 0.0
    %291 = vmatprep.mubr.f32.mxu0 0.0
    %292 = vmatmul.mubr.f32.gmra.mrb[0].mxu0 %v121
    %v293 = vpop.f32.mrb[0].mxu0
    %v294 = vadd.f32 %v224, %v293
    %v295 = vpop.f32.mrb[0].mxu0
    %296 = vdwg.mxu0
    %v297 = vld [vmem:[%s4] sm:$0x1]
    %v299 = vlaneseq
    %v300 = vshrl.u32 %v299, 7
    %v301 = vsub.s32 0, %v300
    %v302 = vrot.slane %v297, %v301
    %v304 = vadd.f32 %v294, %v302
    %v305 = vtanh.pop %v304
    %v306 = vld [vmem:[#allocation6] sm:$0xff]
    %v307 = vld [vmem:[#allocation6 + $0x8] sm:$0xff]
    %v308 = vld [vmem:[#allocation6 + $0x10] sm:$0xff]
    %v309 = vld [vmem:[#allocation6 + $0x18] sm:$0xff]
    %v310 = vld [vmem:[#allocation6 + $0x20] sm:$0xff]
    %v311 = vld [vmem:[#allocation6 + $0x28] sm:$0xff]
    %v312 = vld [vmem:[#allocation6 + $0x30] sm:$0xff]
    %v313 = vld [vmem:[#allocation6 + $0x38] sm:$0xff]
    %v314 = vld [vmem:[#allocation6 + $0x40] sm:$0xff]
    %v315 = vld [vmem:[#allocation6 + $0x48] sm:$0xff]
    %v316 = vld [vmem:[#allocation6 + $0x50] sm:$0xff]
    %v317 = vld [vmem:[#allocation6 + $0x58] sm:$0xff]
    %v318 = vld [vmem:[#allocation6 + $0x60] sm:$0xff]
    %v319 = vld [vmem:[#allocation6 + $0x68] sm:$0xff]
    %v320 = vld [vmem:[#allocation6 + $0x70] sm:$0xff]
    %v321 = vld [vmem:[#allocation6 + $0x78] sm:$0xff]
    %v322 = vld [vmem:[#allocation7] sm:$0xff]
    %v323 = vld [vmem:[#allocation7 + $0x8] sm:$0xff]
    %v324 = vld [vmem:[#allocation7 + $0x10] sm:$0xff]
    %v325 = vld [vmem:[#allocation7 + $0x18] sm:$0xff]
    %v326 = vld [vmem:[#allocation7 + $0x20] sm:$0xff]
    %v327 = vld [vmem:[#allocation7 + $0x28] sm:$0xff]
    %v328 = vld [vmem:[#allocation7 + $0x30] sm:$0xff]
    %v329 = vld [vmem:[#allocation7 + $0x38] sm:$0xff]
    %v330 = vld [vmem:[#allocation7 + $0x40] sm:$0xff]
    %v331 = vld [vmem:[#allocation7 + $0x48] sm:$0xff]
    %v332 = vld [vmem:[#allocation7 + $0x50] sm:$0xff]
    %v333 = vld [vmem:[#allocation7 + $0x58] sm:$0xff]
    %v334 = vld [vmem:[#allocation7 + $0x60] sm:$0xff]
    %v335 = vld [vmem:[#allocation7 + $0x68] sm:$0xff]
    %v336 = vld [vmem:[#allocation7 + $0x70] sm:$0xff]
    %v337 = vld [vmem:[#allocation7 + $0x78] sm:$0xff]
    %338 = vmatprep.subr.mxu0 0.0
    %339 = vmatpush1.msra.mxu0 %v322
    %340 = vmatprep.subr.mxu0 0.0
    %341 = vmatpush1.msra.mxu0 %v323
    %342 = vmatprep.subr.mxu0 0.0
    %343 = vmatpush1.msra.mxu0 %v324
    %344 = vmatprep.subr.mxu0 0.0
    %345 = vmatpush1.msra.mxu0 %v325
    %346 = vmatprep.subr.mxu0 0.0
    %347 = vmatpush1.msra.mxu0 %v326
    %348 = vmatprep.subr.mxu0 0.0
    %349 = vmatpush1.msra.mxu0 %v327
    %350 = vmatprep.subr.mxu0 0.0
    %351 = vmatpush1.msra.mxu0 %v328
    %352 = vmatprep.subr.mxu0 0.0
    %353 = vmatpush1.msra.mxu0 %v329
    %354 = vmatprep.subr.mxu0 0.0
    %355 = vmatpush1.msra.mxu0 %v330
    %356 = vmatprep.subr.mxu0 0.0
    %357 = vmatpush1.msra.mxu0 %v331
    %358 = vmatprep.subr.mxu0 0.0
    %359 = vmatpush1.msra.mxu0 %v332
    %360 = vmatprep.subr.mxu0 0.0
    %361 = vmatpush1.msra.mxu0 %v333
    %362 = vmatprep.subr.mxu0 0.0
    %363 = vmatpush1.msra.mxu0 %v334
    %364 = vmatprep.subr.mxu0 0.0
    %365 = vmatpush1.msra.mxu0 %v335
    %366 = vmatprep.subr.mxu0 0.0
    %367 = vmatpush1.msra.mxu0 %v336
    %368 = vmatprep.subr.mxu0 0.0
    %369 = vmatpush1.msra.mxu0 %v337
    %370 = vmatprep.subr.mxu0 0.0
    %371 = vmatpush1.msra.mxu0 0.0
    %372 = vmatprep.subr.mxu0 0.0
    %373 = vmatpush1.msra.mxu0 0.0
    %374 = vmatprep.subr.mxu0 0.0
    %375 = vmatpush1.msra.mxu0 0.0
    %376 = vmatprep.subr.mxu0 0.0
    %377 = vmatpush1.msra.mxu0 0.0
    %378 = vmatprep.subr.mxu0 0.0
    %379 = vmatpush1.msra.mxu0 0.0
    %380 = vmatprep.subr.mxu0 0.0
    %381 = vmatpush1.msra.mxu0 0.0
    %382 = vmatprep.subr.mxu0 0.0
    %383 = vmatpush1.msra.mxu0 0.0
    %384 = vmatprep.subr.mxu0 0.0
    %385 = vmatpush1.msra.mxu0 0.0
    %386 = vmatprep.subr.mxu0 0.0
    %387 = vmatpush1.msra.mxu0 0.0
    %388 = vmatprep.subr.mxu0 0.0
    %389 = vmatpush1.msra.mxu0 0.0
    %390 = vmatprep.subr.mxu0 0.0
    %391 = vmatpush1.msra.mxu0 0.0
    %392 = vmatprep.subr.mxu0 0.0
    %393 = vmatpush1.msra.mxu0 0.0
    %394 = vmatprep.subr.mxu0 0.0
    %395 = vmatpush1.msra.mxu0 0.0
    %396 = vmatprep.subr.mxu0 0.0
    %397 = vmatpush1.msra.mxu0 0.0
    %398 = vmatprep.subr.mxu0 0.0
    %399 = vmatpush1.msra.mxu0 0.0
    %400 = vmatprep.subr.mxu0 0.0
    %401 = vmatpush1.msra.mxu0 0.0
    %402 = vmatprep.mubr.f32.mxu0 0.0
    %403 = vmatmul.mubr.f32.gmra.mrb[0].mxu0 %v124
    %v404 = vpop.f32.mrb[0].mxu0
    %v405 = vadd.f32 0.0, %v404
    %v406 = vpop.f32.mrb[0].mxu0
    %407 = vdwg.mxu0
    %408 = vmatprep.subr.mxu0 0.0
    %409 = vmatpush1.msra.mxu0 %v306
    %410 = vmatprep.subr.mxu0 0.0
    %411 = vmatpush1.msra.mxu0 %v307
    %412 = vmatprep.subr.mxu0 0.0
    %413 = vmatpush1.msra.mxu0 %v308
    %414 = vmatprep.subr.mxu0 0.0
    %415 = vmatpush1.msra.mxu0 %v309
    %416 = vmatprep.subr.mxu0 0.0
    %417 = vmatpush1.msra.mxu0 %v310
    %418 = vmatprep.subr.mxu0 0.0
    %419 = vmatpush1.msra.mxu0 %v311
    %420 = vmatprep.subr.mxu0 0.0
    %421 = vmatpush1.msra.mxu0 %v312
    %422 = vmatprep.subr.mxu0 0.0
    %423 = vmatpush1.msra.mxu0 %v313
    %424 = vmatprep.subr.mxu0 0.0
    %425 = vmatpush1.msra.mxu0 %v314
    %426 = vmatprep.subr.mxu0 0.0
    %427 = vmatpush1.msra.mxu0 %v315
    %428 = vmatprep.subr.mxu0 0.0
    %429 = vmatpush1.msra.mxu0 %v316
    %430 = vmatprep.subr.mxu0 0.0
    %431 = vmatpush1.msra.mxu0 %v317
    %432 = vmatprep.subr.mxu0 0.0
    %433 = vmatpush1.msra.mxu0 %v318
    %434 = vmatprep.subr.mxu0 0.0
    %435 = vmatpush1.msra.mxu0 %v319
    %436 = vmatprep.subr.mxu0 0.0
    %437 = vmatpush1.msra.mxu0 %v320
    %438 = vmatprep.subr.mxu0 0.0
    %439 = vmatpush1.msra.mxu0 %v321
    %440 = vmatprep.subr.mxu0 0.0
    %441 = vmatpush1.msra.mxu0 0.0
    %442 = vmatprep.subr.mxu0 0.0
    %443 = vmatpush1.msra.mxu0 0.0
    %444 = vmatprep.subr.mxu0 0.0
    %445 = vmatpush1.msra.mxu0 0.0
    %446 = vmatprep.subr.mxu0 0.0
    %447 = vmatpush1.msra.mxu0 0.0
    %448 = vmatprep.subr.mxu0 0.0
    %449 = vmatpush1.msra.mxu0 0.0
    %450 = vmatprep.subr.mxu0 0.0
    %451 = vmatpush1.msra.mxu0 0.0
    %452 = vmatprep.subr.mxu0 0.0
    %453 = vmatpush1.msra.mxu0 0.0
    %454 = vmatprep.subr.mxu0 0.0
    %455 = vmatpush1.msra.mxu0 0.0
    %456 = vmatprep.subr.mxu0 0.0
    %457 = vmatpush1.msra.mxu0 0.0
    %458 = vmatprep.subr.mxu0 0.0
    %459 = vmatpush1.msra.mxu0 0.0
    %460 = vmatprep.subr.mxu0 0.0
    %461 = vmatpush1.msra.mxu0 0.0
    %462 = vmatprep.subr.mxu0 0.0
    %463 = vmatpush1.msra.mxu0 0.0
    %464 = vmatprep.subr.mxu0 0.0
    %465 = vmatpush1.msra.mxu0 0.0
    %466 = vmatprep.subr.mxu0 0.0
    %467 = vmatpush1.msra.mxu0 0.0
    %468 = vmatprep.subr.mxu0 0.0
    %469 = vmatpush1.msra.mxu0 0.0
    %470 = vmatprep.subr.mxu0 0.0
    %471 = vmatpush1.msra.mxu0 0.0
    %472 = vmatprep.mubr.f32.mxu0 0.0
    %473 = vmatmul.mubr.f32.gmra.mrb[0].mxu0 %v305
    %v474 = vpop.f32.mrb[0].mxu0
    %v475 = vadd.f32 %v405, %v474
    %v476 = vpop.f32.mrb[0].mxu0
    %477 = vdwg.mxu0
    %v478 = vld [vmem:[%s7] sm:$0x1]
    %v480 = vlaneseq
    %v481 = vshrl.u32 %v480, 7
    %v482 = vsub.s32 0, %v481
    %v483 = vrot.slane %v478, %v482
    %v485 = vadd.f32 %v475, %v483
    %v486 = vtanh.pop %v485
    %487 = vst [vmem:[%s11] sm:$0xff] %v305
    %488 = vst [vmem:[%s123] sm:$0xff] %v486
    %v489 = vld [vmem:[#allocation9] sm:$0xff]
    %v490 = vld [vmem:[#allocation9 + $0x8] sm:$0xff]
    %v491 = vld [vmem:[#allocation9 + $0x10] sm:$0xff]
    %v492 = vld [vmem:[#allocation9 + $0x18] sm:$0xff]
    %v493 = vld [vmem:[#allocation9 + $0x20] sm:$0xff]
    %v494 = vld [vmem:[#allocation9 + $0x28] sm:$0xff]
    %v495 = vld [vmem:[#allocation9 + $0x30] sm:$0xff]
    %v496 = vld [vmem:[#allocation9 + $0x38] sm:$0xff]
    %v497 = vld [vmem:[#allocation9 + $0x40] sm:$0xff]
    %v498 = vld [vmem:[#allocation9 + $0x48] sm:$0xff]
    %v499 = vld [vmem:[#allocation9 + $0x50] sm:$0xff]
    %v500 = vld [vmem:[#allocation9 + $0x58] sm:$0xff]
    %v501 = vld [vmem:[#allocation9 + $0x60] sm:$0xff]
    %v502 = vld [vmem:[#allocation9 + $0x68] sm:$0xff]
    %v503 = vld [vmem:[#allocation9 + $0x70] sm:$0xff]
    %v504 = vld [vmem:[#allocation9 + $0x78] sm:$0xff]
    %v505 = vld [vmem:[%s9] sm:$0x1]
    %v507 = vlaneseq
    %v508 = vshrl.u32 %v507, 7
    %v509 = vsub.s32 0, %v508
    %v510 = vrot.slane %v505, %v509
    %512 = vmatprep.subr.mxu0 0.0
    %513 = vmatpush1.msra.mxu0 %v489
    %514 = vmatprep.subr.mxu0 0.0
    %515 = vmatpush1.msra.mxu0 %v490
    %516 = vmatprep.subr.mxu0 0.0
    %517 = vmatpush1.msra.mxu0 %v491
    %518 = vmatprep.subr.mxu0 0.0
    %519 = vmatpush1.msra.mxu0 %v492
    %520 = vmatprep.subr.mxu0 0.0
    %521 = vmatpush1.msra.mxu0 %v493
    %522 = vmatprep.subr.mxu0 0.0
    %523 = vmatpush1.msra.mxu0 %v494
    %524 = vmatprep.subr.mxu0 0.0
    %525 = vmatpush1.msra.mxu0 %v495
    %526 = vmatprep.subr.mxu0 0.0
    %527 = vmatpush1.msra.mxu0 %v496
    %528 = vmatprep.subr.mxu0 0.0
    %529 = vmatpush1.msra.mxu0 %v497
    %530 = vmatprep.subr.mxu0 0.0
    %531 = vmatpush1.msra.mxu0 %v498
    %532 = vmatprep.subr.mxu0 0.0
    %533 = vmatpush1.msra.mxu0 %v499
    %534 = vmatprep.subr.mxu0 0.0
    %535 = vmatpush1.msra.mxu0 %v500
    %536 = vmatprep.subr.mxu0 0.0
    %537 = vmatpush1.msra.mxu0 %v501
    %538 = vmatprep.subr.mxu0 0.0
    %539 = vmatpush1.msra.mxu0 %v502
    %540 = vmatprep.subr.mxu0 0.0
    %541 = vmatpush1.msra.mxu0 %v503
    %542 = vmatprep.subr.mxu0 0.0
    %543 = vmatpush1.msra.mxu0 %v504
    %544 = vmatprep.subr.mxu0 0.0
    %545 = vmatpush1.msra.mxu0 0.0
    %546 = vmatprep.subr.mxu0 0.0
    %547 = vmatpush1.msra.mxu0 0.0
    %548 = vmatprep.subr.mxu0 0.0
    %549 = vmatpush1.msra.mxu0 0.0
    %550 = vmatprep.subr.mxu0 0.0
    %551 = vmatpush1.msra.mxu0 0.0
    %552 = vmatprep.subr.mxu0 0.0
    %553 = vmatpush1.msra.mxu0 0.0
    %554 = vmatprep.subr.mxu0 0.0
    %555 = vmatpush1.msra.mxu0 0.0
    %556 = vmatprep.subr.mxu0 0.0
    %557 = vmatpush1.msra.mxu0 0.0
    %558 = vmatprep.subr.mxu0 0.0
    %559 = vmatpush1.msra.mxu0 0.0
    %560 = vmatprep.subr.mxu0 0.0
    %561 = vmatpush1.msra.mxu0 0.0
    %562 = vmatprep.subr.mxu0 0.0
    %563 = vmatpush1.msra.mxu0 0.0
    %564 = vmatprep.subr.mxu0 0.0
    %565 = vmatpush1.msra.mxu0 0.0
    %566 = vmatprep.subr.mxu0 0.0
    %567 = vmatpush1.msra.mxu0 0.0
    %568 = vmatprep.subr.mxu0 0.0
    %569 = vmatpush1.msra.mxu0 0.0
    %570 = vmatprep.subr.mxu0 0.0
    %571 = vmatpush1.msra.mxu0 0.0
    %572 = vmatprep.subr.mxu0 0.0
    %573 = vmatpush1.msra.mxu0 0.0
    %574 = vmatprep.subr.mxu0 0.0
    %575 = vmatpush1.msra.mxu0 0.0
    %576 = vmatprep.mubr.f32.mxu0 0.0
    %577 = vmatmul.mubr.f32.gmra.mrb[0].mxu0 %v486
    %v578 = vpop.f32.mrb[0].mxu0
    %v579 = vadd.f32 %v510, %v578
    %v580 = vpop.f32.mrb[0].mxu0
    %581 = vdwg.mxu0
    %582 = vmax.xlane.f32.xlu0 %v579
    %v583 = vpop.xlane.xlu0 %582
    %v584 = vsub.f32 %v579, %v583
    %v585 = vmul.f32 %v584, 1.442695
    %v586 = vpow.pop %v585
    %587 = vadd.xlane.f32.xlu0 %v586
    %v588 = vpop.xlane.xlu0 %587
    %v589 = vlog2.pop %v588
    %v590 = vmul.f32 %v589, 0.6931472
    %v591 = vsub.f32 %v584, %v590
    %592 = vst [vmem:[%s10] sm:$0xff] %v591
    // Predicated region
    $region66: #{charrnn_forward.1} parent=1 // pred_check
      _
    $region67: #{charrnn_forward.1} parent=1 // pred_check_branch
      %594 = sbr.rel (0) target = $region69
    $region68: #{charrnn_forward.1} parent=1 // pred_region
      _
    $region69: #{charrnn_forward.1} parent=1 // pred_fallthru
      _
    // Predicated region
    $region70: #{charrnn_forward.1} parent=1 // pred_check
      _
    $region71: #{charrnn_forward.1} parent=1 // pred_check_branch
      %596 = sbr.rel (0) target = $region73
    $region72: #{charrnn_forward.1} parent=1 // pred_region
      _
    $region73: #{charrnn_forward.1} parent=1 // pred_fallthru
      _
    // Predicated region
    $region74: #{charrnn_forward.1} parent=1 // pred_check
      _
    $region75: #{charrnn_forward.1} parent=1 // pred_check_branch
      %598 = sbr.rel (0) target = $region77
    $region76: #{charrnn_forward.1} parent=1 // pred_region
      _
    $region77: #{charrnn_forward.1} parent=1 // pred_fallthru
      _
    // Predicated region
    $region78: #{charrnn_forward.1} parent=1 // pred_check
      _
    $region79: #{charrnn_forward.1} parent=1 // pred_check_branch
      %600 = sbr.rel (0) target = $region81
    $region80: #{charrnn_forward.1} parent=1 // pred_region
      _
    $region81: #{charrnn_forward.1} parent=1 // pred_fallthru
      _
    %601 = vsyncpa [#allocation3], 1
    %602 = vsyncpa [#allocation5], 1
    %603 = vsyncpa [#allocation8], 1

</llo_original>
